<compile_context>
chip_gen: v6e
topology: v6e:2x2x1
jax: 0.10.0
libtpu: 0.0.40
codegen_flags: <defaults>
</compile_context>

<pallas_src>
import jax
import jax.numpy as jnp
from jax.experimental import pallas as pl
from jax.experimental.pallas import tpu as pltpu


def _round_up(x, mult):
    return ((x + mult - 1) // mult) * mult


def _vmem_capacity_bytes():
    try:
        return int(pltpu.get_tpu_info().vmem_capacity_bytes)
    except Exception:
        return 64 << 20  # conservative fallback: v7x per-TensorCore VMEM


def _low_rank_rotate_kernel(x_ref, w_ref, o_ref):
    # x_ref: (TM, n) tile, w_ref: (n, m) resident, o_ref: (TM, m) tile.
    x = x_ref[...].astype(w_ref.dtype)              # fuse x.to(weight.dtype)
    o_ref[...] = jnp.dot(
        x, w_ref[...], preferred_element_type=jnp.float32
    ).astype(o_ref.dtype)


def low_rank_rotate(x, weight, *, force_pallas=False):
    """y = x.astype(weight.dtype) @ weight.   x: (..., n), weight: (n, m)."""
    n, m = weight.shape
    lead_shape = x.shape[:-1]
    assert x.shape[-1] == n, f"last dim of x ({x.shape[-1]}) must equal n ({n})"

    x2d = x.reshape(-1, n)
    M = x2d.shape[0]

    x_itemsize = jnp.dtype(x2d.dtype).itemsize
    w_itemsize = jnp.dtype(weight.dtype).itemsize

    # Small-problem fast path: custom-call / grid / DMA setup overhead dominates.
    if not force_pallas and M * n * x_itemsize < (256 << 10):
        return jnp.matmul(x2d.astype(weight.dtype), weight).reshape(*lead_shape, m)

    # ---- VMEM byte-budget tiling (generation aware) ----
    vmem_cap = _vmem_capacity_bytes()
    small_vmem = vmem_cap <= (64 << 20)       # v7x-class: 64 MiB/TC, fast HBM
    x_tile_budget = (8 << 20) if small_vmem else (6 << 20)

    row_bytes_x = n * x_itemsize
    row_bytes_o = m * w_itemsize

    tm = max(32, (x_tile_budget // row_bytes_x) // 32 * 32)
    tm = min(tm, _round_up(M, 32))            # never bigger than the problem

    grid_m = pl.cdiv(M, tm)
    # On 2-TC chips make sure the "parallel" row axis actually has >= 2 steps.
    if small_vmem and grid_m == 1 and M >= 64:
        tm = _round_up(pl.cdiv(M, 2), 32)
        grid_m = pl.cdiv(M, tm)

    # Scoped-VMEM limit: double-buffered x & out tiles + weight + headroom.
    need = 2 * tm * (row_bytes_x + row_bytes_o) + 2 * n * m * w_itemsize
    vmem_limit = int(min(vmem_cap, max(need + (4 << 20), 32 << 20)))

    cost = pl.CostEstimate(
        flops=2 * M * n * m,
        transcendentals=0,
        bytes_accessed=(x_itemsize * M * n + w_itemsize * (n * m + M * m)),
    )

    # TODO(synk): if deployed n, m are genuinely sub-128, lane-pack k=128//n
    # logical rows per vreg row (block-diagonal weight) for lane-dense stores.
    out2d = pl.pallas_call(
        _low_rank_rotate_kernel,
        out_shape=jax.ShapeDtypeStruct((M, m), weight.dtype),
        grid=(grid_m,),
        in_specs=[
            pl.BlockSpec((tm, n), lambda i: (i, 0)),   # stream x row-tiles
            pl.BlockSpec((n, m), lambda i: (0, 0)),    # weight stays resident
        ],
        out_specs=pl.BlockSpec((tm, m), lambda i: (i, 0)),
        compiler_params=pltpu.CompilerParams(
            dimension_semantics=("parallel",),         # 2 TCs on v7x
            vmem_limit_bytes=vmem_limit,
        ),
        cost_estimate=cost,
    )(x2d, weight)

    return out2d.reshape(*lead_shape, m)


def make_orthogonal_weight(key, n, m, dtype=jnp.float32):
    """Deterministic stand-in for torch.nn.init.orthogonal_ on an (n, m) param."""
    a = jax.random.normal(key, (n, m), dtype=jnp.float32)
    # QR of an (n, m) Gaussian (n >= m) gives Q with orthonormal columns.
    q, r = jnp.linalg.qr(a)
    d = jnp.diagonal(r)
    d = jnp.where(d == 0, 1.0, jnp.sign(d))    # guard sign(0) -> zeroed column
    q = q * d[None, :]
    return q.astype(dtype)


if __name__ == "__main__":
    key = jax.random.PRNGKey(0)
    k_w, k_x = jax.random.split(key)

    batch, seq, n, m = 2, 8, 32, 8  # low-rank rotation: n -> m, m <= n

    weight = make_orthogonal_weight(k_w, n, m)           # (n, m) orthonormal cols
    x = jax.random.normal(k_x, (batch, seq, n), jnp.float32)

    # Pallas path (forced -- the demo is small enough to hit the XLA fast path
    # otherwise); also exercises the no-pad ragged last block (M=16 < tm=32).
    y = low_rank_rotate(x, weight, force_pallas=True)
    y = jax.block_until_ready(y)
    y_ref = jnp.matmul(x.astype(weight.dtype), weight)
    assert y.shape == (batch, seq, m), y.shape
    assert jnp.allclose(y, y_ref, atol=1e-5, rtol=1e-5)

    # Fused in-kernel dtype cast (x.to(weight.dtype)) with a bf16 input.
    x_bf16 = x.astype(jnp.bfloat16)
    y_b = jax.block_until_ready(low_rank_rotate(x_bf16, weight, force_pallas=True))
    y_b_ref = jnp.matmul(x_bf16.astype(weight.dtype), weight)
    assert y_b.dtype == weight.dtype
    assert jnp.allclose(y_b, y_b_ref, atol=1e-2, rtol=1e-2)

    # Small-problem fast path (plain XLA matmul), default behavior at this size.
    y_fast = jax.block_until_ready(low_rank_rotate(x, weight))
    assert jnp.allclose(y_fast, y_ref, atol=1e-5, rtol=1e-5)

    print("KERNEL_OK")
</pallas_src>

<mosaic_0001>
module attributes {stable_mosaic.version = 11 : i64} {
  func.func @_low_rank_rotate_kernel(%arg0: i32, %arg1: memref<32x32xf32, #tpu.memory_space<vmem>>, %arg2: memref<32x8xf32, #tpu.memory_space<vmem>>, %arg3: memref<32x8xf32, #tpu.memory_space<vmem>>) attributes {dimension_semantics = [#tpu.dimension_semantics<parallel>], iteration_bounds = array<i64: 1>, scalar_prefetch = 0 : i64, scratch_operands = 0 : i64, tpu.core_type = #tpu.core_type<tc>, window_params = [{transform_indices = @transform_0, window_bounds = array<i64: 32, 32>}, {pipeline_mode = #tpu.pipeline_mode<synchronous>, transform_indices = @transform_1, window_bounds = array<i64: 32, 8>}, {transform_indices = @transform_2, window_bounds = array<i64: 32, 8>}]} {
    %c0 = arith.constant 0 : index
    %c0_0 = arith.constant 0 : index
    %0 = vector.load %arg1[%c0, %c0_0] : memref<32x32xf32, #tpu.memory_space<vmem>>, vector<32x32xf32>
    %c0_1 = arith.constant 0 : index
    %c0_2 = arith.constant 0 : index
    %1 = vector.load %arg2[%c0_1, %c0_2] : memref<32x8xf32, #tpu.memory_space<vmem>>, vector<32x8xf32>
    %cst = arith.constant dense<0.000000e+00> : vector<32x8xf32>
    %2 = tpu.matmul %0, %1, %cst {dimension_numbers = #tpu.dot_dimension_numbers<[1], [0], [0], [1], [0, 0, 1, 1], [], []>} : vector<32x32xf32>, vector<32x8xf32>, vector<32x8xf32> -> vector<32x8xf32>
    %c0_3 = arith.constant 0 : index
    %c0_4 = arith.constant 0 : index
    %3 = vector.load %arg3[%c0_3, %c0_4] : memref<32x8xf32, #tpu.memory_space<vmem>>, vector<32x8xf32>
    tpu.vector_store %arg3[%c0_3, %c0_4], %2 {strides = array<i32>} : memref<32x8xf32, #tpu.memory_space<vmem>>, vector<32x8xf32>,
    return
  }
  func.func @transform_0(%arg0: i32) -> (i32, i32) {
    %c0_i32 = arith.constant 0 : i32
    %c0_i32_0 = arith.constant 0 : i32
    return %arg0, %c0_i32 : i32, i32
  }
  func.func @transform_1(%arg0: i32) -> (i32, i32) {
    %c0_i32 = arith.constant 0 : i32
    %c0_i32_0 = arith.constant 0 : i32
    %c0_i32_1 = arith.constant 0 : i32
    return %c0_i32, %c0_i32_0 : i32, i32
  }
  func.func @transform_2(%arg0: i32) -> (i32, i32) {
    %c0_i32 = arith.constant 0 : i32
    %c0_i32_0 = arith.constant 0 : i32
    return %arg0, %c0_i32 : i32, i32
  }
}

</mosaic_0001>

<llo_original>
// kernel: tpu_custom_call.1
$region0: #{tpu_custom_call.1}
  #allocation0 [shape = 'u32[]', space=smem, size = 0x4, offset = 0x4, fixed_abs, tag = 'smem constant byte address 0x4 - core index']
  #allocation1 [shape = 'u32[144,128]{1,0:T(1,128)}', space=vmem, size = 0x12000, scoped, tag = 'internal scratch']
  %s0 = inlined_call_operand.vmem [shape: f32[16,32], index: 0, kind: input, shape index: {}]
  %s1 = inlined_call_operand.vmem [shape: f32[32,8], index: 1, kind: input, shape index: {}]
  %s2 = inlined_call_operand.vmem [shape: f32[16,8], index: 2, kind: output, shape index: {}]
  %s3 = sld [smem:[#allocation0]]
  $region52: #{tpu_custom_call.1} parent=0
    _
  %s5 = ssub.s32 1, %s3
  %s6 = scalar_select 0, %s5, %s3
  $region1: #{tpu_custom_call.1} parent=0
    #allocation2 [shape = 'u8[16384]{0}', space=vmem, size = 0x4000, scoped, tag = 'output window, operand 0, single buffered']
    // Predicated region
    $region2: #{tpu_custom_call.1} parent=1 // pred_check
      _
    $region3: #{tpu_custom_call.1} parent=1 // pred_check_branch
      %8 = sbr.rel (0) target = $region5
    $region4: #{tpu_custom_call.1} parent=1 // pred_region
      _
    $region5: #{tpu_custom_call.1} parent=1 // pred_fallthru
      _
    // Predicated region
    $region6: #{tpu_custom_call.1} parent=1 // pred_check
      _
    $region7: #{tpu_custom_call.1} parent=1 // pred_check_branch
      %10 = sbr.rel (0) target = $region9
    $region8: #{tpu_custom_call.1} parent=1 // pred_region
      _
    $region9: #{tpu_custom_call.1} parent=1 // pred_fallthru
      _
    %v11 = vld [vmem:[%s0] sm:$0xff]
    %v12 = vld [vmem:[%s0 + $0x8] sm:$0xff]
    %v13 = vld [vmem:[%s0 + $0x10] sm:$0xff]
    %v14 = vld [vmem:[%s0 + $0x18] sm:$0xff]
    %v15 = vld [vmem:[%s1] sm:$0xff]
    %v16 = vld [vmem:[%s1 + $0x8] sm:$0xff]
    %v17 = vld [vmem:[%s1 + $0x10] sm:$0xff]
    %v18 = vld [vmem:[%s1 + $0x18] sm:$0xff]
    %vm19 = vcmask 261120
    %v21 = vsel %vm19, %v11, 0
    %v24 = vsel %vm19, %v12, 0
    %v27 = vsel %vm19, %v13, 0
    %v30 = vsel %vm19, %v14, 0
    %32 = vmatprep.subr.mxu0 0.0
    %33 = vmatpush1.msra.mxu0 0.0
    %34 = vmatprep.subr.mxu0 0.0
    %35 = vmatpush1.msra.mxu0 0.0
    %36 = vmatprep.subr.mxu0 0.0
    %37 = vmatpush1.msra.mxu0 0.0
    %38 = vmatprep.subr.mxu0 0.0
    %39 = vmatpush1.msra.mxu0 0.0
    %40 = vmatprep.subr.mxu0 0.0
    %41 = vmatpush1.msra.mxu0 0.0
    %42 = vmatprep.subr.mxu0 0.0
    %43 = vmatpush1.msra.mxu0 0.0
    %44 = vmatprep.subr.mxu0 0.0
    %45 = vmatpush1.msra.mxu0 0.0
    %46 = vmatprep.subr.mxu0 0.0
    %47 = vmatpush1.msra.mxu0 0.0
    %48 = vmatprep.subr.mxu0 0.0
    %49 = vmatpush1.msra.mxu0 0.0
    %50 = vmatprep.subr.mxu0 0.0
    %51 = vmatpush1.msra.mxu0 0.0
    %52 = vmatprep.subr.mxu0 0.0
    %53 = vmatpush1.msra.mxu0 0.0
    %54 = vmatprep.subr.mxu0 0.0
    %55 = vmatpush1.msra.mxu0 0.0
    %56 = vmatprep.subr.mxu0 0.0
    %57 = vmatpush1.msra.mxu0 %v18
    %58 = vmatprep.subr.mxu0 0.0
    %59 = vmatpush1.msra.mxu0 %v17
    %60 = vmatprep.subr.mxu0 0.0
    %61 = vmatpush1.msra.mxu0 %v16
    %62 = vmatprep.subr.mxu0 0.0
    %63 = vmatpush1.msra.mxu0 %v15
    %64 = vmatprep.subr.mxu0 0.0
    %65 = vmatpush2.msra.mxu0 0.0
    %66 = vmatprep.subr.mxu0 0.0
    %67 = vmatpush2.msra.mxu0 0.0
    %68 = vmatprep.subr.mxu0 0.0
    %69 = vmatpush2.msra.mxu0 0.0
    %70 = vmatprep.subr.mxu0 0.0
    %71 = vmatpush2.msra.mxu0 0.0
    %72 = vmatprep.subr.mxu0 0.0
    %73 = vmatpush2.msra.mxu0 0.0
    %74 = vmatprep.subr.mxu0 0.0
    %75 = vmatpush2.msra.mxu0 0.0
    %76 = vmatprep.subr.mxu0 0.0
    %77 = vmatpush2.msra.mxu0 0.0
    %78 = vmatprep.subr.mxu0 0.0
    %79 = vmatpush2.msra.mxu0 0.0
    %80 = vmatprep.subr.mxu0 0.0
    %81 = vmatpush2.msra.mxu0 0.0
    %82 = vmatprep.subr.mxu0 0.0
    %83 = vmatpush2.msra.mxu0 0.0
    %84 = vmatprep.subr.mxu0 0.0
    %85 = vmatpush2.msra.mxu0 0.0
    %86 = vmatprep.subr.mxu0 0.0
    %87 = vmatpush2.msra.mxu0 0.0
    %88 = vmatprep.subr.mxu0 0.0
    %89 = vmatpush2.msra.mxu0 0.0
    %90 = vmatprep.subr.mxu0 0.0
    %91 = vmatpush2.msra.mxu0 0.0
    %92 = vmatprep.subr.mxu0 0.0
    %93 = vmatpush2.msra.mxu0 0.0
    %94 = vmatprep.subr.mxu0 0.0
    %95 = vmatpush2.msra.mxu0 0.0
    %96 = vmatprep.mubr.f32.mxu0 0.0
    %97 = vmatmul.mubr.f32.gmra.mxu0 %v21
    %v98 = vpop.f32.mrf.mxu0
    %v99 = vadd.f32 0.0, %v98
    %v100 = vpop.f32.mrf.mxu0
    %101 = vmatprep.mubr.f32.mxu0 0.0
    %102 = vmatmul.mubr.f32.gmra.mxu0 %v24
    %v103 = vpop.f32.mrf.mxu0
    %v104 = vadd.f32 0.0, %v103
    %v105 = vpop.f32.mrf.mxu0
    %106 = vmatprep.mubr.f32.mxu0 0.0
    %107 = vmatmul.mubr.f32.gmra.mxu0 %v27
    %v108 = vpop.f32.mrf.mxu0
    %v109 = vadd.f32 0.0, %v108
    %v110 = vpop.f32.mrf.mxu0
    %111 = vmatprep.mubr.f32.mxu0 0.0
    %112 = vmatmul.mubr.f32.gmra.mxu0 %v30
    %v113 = vpop.f32.mrf.mxu0
    %v114 = vadd.f32 0.0, %v113
    %v115 = vpop.f32.mrf.mxu0
    %116 = vdwg.mxu0
    %vm117 = vcmask 64512
    %118 = vst.msk [vmem:[#allocation2] sm:$0xff] %vm117, %v99
    %119 = vst.msk [vmem:[#allocation2 + $0x8] sm:$0xff] %vm117, %v104
    %120 = vst.msk [vmem:[#allocation2 + $0x10] sm:$0xff] %vm117, %v109
    %121 = vst.msk [vmem:[#allocation2 + $0x18] sm:$0xff] %vm117, %v114
    // Predicated region
    $region10: #{tpu_custom_call.1} parent=1 // pred_check
      _
    $region11: #{tpu_custom_call.1} parent=1 // pred_check_branch
      %123 = sbr.rel (0) target = $region13
    $region12: #{tpu_custom_call.1} parent=1 // pred_region
      // Predicated region
      $region14: #{tpu_custom_call.1} parent=12 // pred_check
        _
      $region15: #{tpu_custom_call.1} parent=12 // pred_check_branch
        %125 = sbr.rel (0) target = $region17
      $region16: #{tpu_custom_call.1} parent=12 // pred_region
        // Predicated region
        $region18: #{tpu_custom_call.1} parent=16 // pred_check
          _
        $region19: #{tpu_custom_call.1} parent=16 // pred_check_branch
          %127 = sbr.rel (0) target = $region21
        $region20: #{tpu_custom_call.1} parent=16 // pred_region
          // Predicated region
          $region33: #{tpu_custom_call.1} parent=20 // pred_check
            _
          $region34: #{tpu_custom_call.1} parent=20 // pred_check_branch
            %145 = sbr.rel (0) target = $region36
          $region35: #{tpu_custom_call.1} parent=20 // pred_region
            loop: start=0, step=1, limit=1
            $region37: #{tpu_custom_call.1} parent=35 // loop_pre_header
              _
            $region38: #{tpu_custom_call.1} parent=35 // loop_header
              %s147 = sphi 0, %s151
              %p148 = scmp.ge.s32.totalorder %s147, 1
              %s152 = sphi [#allocation2], [#allocation2]
              %s153 = sphi %s2, %s2
            $region39: #{tpu_custom_call.1} parent=35 // loop_header_branch
              %150 = sbr.rel (%p148) target = $region43
            $region40: #{tpu_custom_call.1} parent=35 // loop_body
              %v154 = vld [vmem:[%s152] sm:$0xff]
              %155 = vst [vmem:[%s153] sm:$0xff] %v154
              %v156 = vld [vmem:[%s152 + $0x8] sm:$0xff]
              %157 = vst [vmem:[%s153 + $0x8] sm:$0xff] %v156
            $region41: #{tpu_custom_call.1} parent=35 // loop_footer
              %s151 = sadd.s32 1, %s147
            $region42: #{tpu_custom_call.1} parent=35 // loop_footer_branch
              %146 = sbr.rel target = $region38
            $region43: #{tpu_custom_call.1} parent=35 // loop_exit
              _
          $region36: #{tpu_custom_call.1} parent=20 // pred_fallthru
            _
          // Predicated region
          $region44: #{tpu_custom_call.1} parent=20 // pred_check
            _
          $region45: #{tpu_custom_call.1} parent=20 // pred_check_branch
            %159 = sbr.rel target = $region47
          $region46: #{tpu_custom_call.1} parent=20 // pred_region
            _
          $region47: #{tpu_custom_call.1} parent=20 // pred_fallthru
            _
        $region21: #{tpu_custom_call.1} parent=16 // pred_fallthru
          _
        // Predicated region
        $region22: #{tpu_custom_call.1} parent=16 // pred_check
          _
        $region23: #{tpu_custom_call.1} parent=16 // pred_check_branch
          %129 = sbr.rel target = $region25
        $region24: #{tpu_custom_call.1} parent=16 // pred_region
          %s131 = ssub.s32 256, 1
          loop: start=0, step=1, limit=1
          $region26: #{tpu_custom_call.1} parent=24 // loop_pre_header
            _
          $region27: #{tpu_custom_call.1} parent=24 // loop_header
            %s133 = sphi 0, %s137
            %p134 = scmp.ge.s32.totalorder %s133, 1
            %s138 = sphi [#allocation2], [#allocation2]
            %s139 = sphi %s2, %s2
          $region28: #{tpu_custom_call.1} parent=24 // loop_header_branch
            %136 = sbr.rel (%p134) target = $region32
          $region29: #{tpu_custom_call.1} parent=24 // loop_body
            %v140 = vld [vmem:[%s138] sm:%s131]
            %141 = vst [vmem:[%s139] sm:%s131] %v140
            %v142 = vld [vmem:[%s138 + $0x8] sm:%s131]
            %143 = vst [vmem:[%s139 + $0x8] sm:%s131] %v142
          $region30: #{tpu_custom_call.1} parent=24 // loop_footer
            %s137 = sadd.s32 1, %s133
          $region31: #{tpu_custom_call.1} parent=24 // loop_footer_branch
            %132 = sbr.rel target = $region27
          $region32: #{tpu_custom_call.1} parent=24 // loop_exit
            _
        $region25: #{tpu_custom_call.1} parent=16 // pred_fallthru
          _
      $region17: #{tpu_custom_call.1} parent=12 // pred_fallthru
        _
      %160 = vnop
    $region13: #{tpu_custom_call.1} parent=1 // pred_fallthru
      _
    // Predicated region
    $region48: #{tpu_custom_call.1} parent=1 // pred_check
      _
    $region49: #{tpu_custom_call.1} parent=1 // pred_check_branch
      %162 = sbr.rel (0) target = $region51
    $region50: #{tpu_custom_call.1} parent=1 // pred_region
      _
    $region51: #{tpu_custom_call.1} parent=1 // pred_fallthru
      _

</llo_original>
